<compile_context>
chip_gen: v6e
topology: v6e:2x2x1
jax: 0.10.0
libtpu: 0.0.40
codegen_flags: <defaults>
</compile_context>

<pallas_src>
import functools

import jax
import jax.numpy as jnp
from jax.experimental import pallas as pl
from jax.experimental.pallas import tpu as pltpu


def _max_pool_kernel(x_ref, o_ref, *, ts, seq_len, mask_seq, fill):
    # x_ref: (TB, TS, TD) input tile; o_ref: (TB, TD) output-resident running max.
    s = pl.program_id(2)  # innermost (sequence-reduction) grid axis

    x = x_ref[...]  # keep input dtype; max is exact, no upcast needed
    if mask_seq:
        # Mask Pallas block padding on the (possibly partial) last seq tile.
        row = jax.lax.broadcasted_iota(jnp.int32, x.shape, dimension=1)
        valid = (s * ts + row) < seq_len
        x = jnp.where(valid, x, jnp.asarray(fill, dtype=x.dtype))

    blk_max = jnp.max(x, axis=1)  # (TB, TD)

    @pl.when(s == 0)
    def _():
        o_ref[...] = blk_max

    @pl.when(s > 0)
    def _():
        o_ref[...] = jnp.maximum(o_ref[...], blk_max)


def max_pooling(inputs: jax.Array, *, seq_tile: int | None = None) -> jax.Array:
    """inputs: [bz, seq_len, dim] -> [bz, dim] (max over seq_len)."""
    assert inputs.ndim == 3
    bz, seq_len, dim = inputs.shape
    dtype = inputs.dtype
    itemsize = jnp.dtype(dtype).itemsize

    # Sublane packing: 8 rows per vreg for 32-bit, 16 for 16-bit, 32 for 8-bit.
    sub = 8 * max(1, 4 // itemsize)

    # Batch tile: full batch if small, else one sublane-dense group (multiple
    # of 8) so the (TB, dim) output tile gets unmasked stores.
    tb = bz if bz <= sub else sub

    # Feature (lane) tile: keep full dim unless it is large and 512-aligned;
    # tiling dim adds a second parallel axis (keeps both v7x TCs busy when bz
    # collapses to a single batch block).
    td = 512 if (dim % 512 == 0 and dim > 512) else dim

    # Sequence tile: target ~2 MiB input blocks, multiple of the sublane pack.
    if seq_tile is not None:
        ts = min(seq_tile, seq_len)
        if ts < seq_len:
            ts = max(sub, (ts // sub) * sub)
    else:
        target_bytes = 2 * 1024 * 1024
        ts = target_bytes // max(1, tb * td * itemsize)
        ts = max(sub, (ts // sub) * sub)
        if ts >= seq_len:
            ts = seq_len

    mask_seq = (seq_len % ts) != 0
    if jnp.issubdtype(dtype, jnp.floating):
        fill = float("-inf")
    else:
        fill = int(jnp.iinfo(dtype).min)

    grid = (pl.cdiv(bz, tb), pl.cdiv(dim, td), pl.cdiv(seq_len, ts))

    # Explicit VMEM budget: double-buffered input blocks + resident output,
    # always safely inside v7x's 64 MiB while generous for the ~2 MiB tiles.
    block_in = tb * ts * td * itemsize
    block_out = tb * td * itemsize
    vmem_limit = int(min(64 * 2**20, max(32 * 2**20, 4 * (block_in + block_out))))

    kernel = functools.partial(
        _max_pool_kernel, ts=ts, seq_len=seq_len, mask_seq=mask_seq, fill=fill
    )

    return pl.pallas_call(
        kernel,
        out_shape=jax.ShapeDtypeStruct((bz, dim), dtype),
        grid_spec=pltpu.PrefetchScalarGridSpec(
            num_scalar_prefetch=0,
            grid=grid,
            in_specs=[pl.BlockSpec((tb, ts, td), lambda b, d, s: (b, s, d))],
            out_specs=pl.BlockSpec((tb, td), lambda b, d, s: (b, d)),
        ),
        compiler_params=pltpu.CompilerParams(
            dimension_semantics=("parallel", "parallel", "arbitrary"),
            vmem_limit_bytes=vmem_limit,
        ),
    )(inputs)


if __name__ == "__main__":
    key = jax.random.PRNGKey(0)

    # Small shape consistent with the module: [bz, seq_len, dim].
    bz, seq_len, dim = 2, 8, 32
    x = jax.random.normal(key, (bz, seq_len, dim), dtype=jnp.float32)
    out = max_pooling(x)
    jax.block_until_ready(out)
    ref = jnp.max(x, axis=1)
    assert out.shape == (bz, dim)
    assert jnp.allclose(out, ref), "mismatch vs reference (single-block path)"

    # Exercise the tiled-reduction + remainder-masking path with a small
    # explicit seq tile (seq_len % ts != 0).
    key2 = jax.random.PRNGKey(1)
    bz2, seq_len2, dim2 = 2, 20, 32
    x2 = jax.random.normal(key2, (bz2, seq_len2, dim2), dtype=jnp.float32)
    out2 = max_pooling(x2, seq_tile=8)
    jax.block_until_ready(out2)
    ref2 = jnp.max(x2, axis=1)
    assert out2.shape == (bz2, dim2)
    assert jnp.allclose(out2, ref2), "mismatch vs reference (tiled/masked path)"

    print("KERNEL_OK")
</pallas_src>

<mosaic_0001>
module attributes {stable_mosaic.version = 11 : i64} {
  func.func @_max_pool_kernel(%arg0: i32, %arg1: i32, %arg2: i32, %arg3: memref<2x8x32xf32, #tpu.memory_space<vmem>>, %arg4: memref<2x32xf32, #tpu.memory_space<vmem>>) attributes {dimension_semantics = [#tpu.dimension_semantics<parallel>, #tpu.dimension_semantics<parallel>, #tpu.dimension_semantics<arbitrary>], iteration_bounds = array<i64: 1, 1, 1>, scalar_prefetch = 0 : i64, scratch_operands = 0 : i64, tpu.core_type = #tpu.core_type<tc>, window_params = [{transform_indices = @transform_0, window_bounds = array<i64: 2, 8, 32>}, {transform_indices = @transform_1, window_bounds = array<i64: 2, 32>}]} {
    %c0 = arith.constant 0 : index
    %c0_0 = arith.constant 0 : index
    %c0_1 = arith.constant 0 : index
    %0 = vector.load %arg3[%c0, %c0_0, %c0_1] : memref<2x8x32xf32, #tpu.memory_space<vmem>>, vector<2x8x32xf32>
    %cst = arith.constant dense<0xFF800000> : vector<2x32xf32>
    %1 = vector.multi_reduction <maximumf>, %0, %cst [1] : vector<2x8x32xf32> to vector<2x32xf32>
    %c0_i32 = arith.constant 0 : i32
    %2 = arith.cmpi eq, %arg2, %c0_i32 : i32
    %3 = arith.extui %2 : i1 to i32
    %c0_i32_2 = arith.constant 0 : i32
    %4 = arith.cmpi ne, %3, %c0_i32_2 : i32
    scf.if %4 {
      %c0_5 = arith.constant 0 : index
      %c0_6 = arith.constant 0 : index
      %8 = vector.load %arg4[%c0_5, %c0_6] : memref<2x32xf32, #tpu.memory_space<vmem>>, vector<2x32xf32>
      tpu.vector_store %arg4[%c0_5, %c0_6], %1 {strides = array<i32>} : memref<2x32xf32, #tpu.memory_space<vmem>>, vector<2x32xf32>,
    } else {
    }
    %c0_i32_3 = arith.constant 0 : i32
    %5 = arith.cmpi sgt, %arg2, %c0_i32_3 : i32
    %6 = arith.extui %5 : i1 to i32
    %c0_i32_4 = arith.constant 0 : i32
    %7 = arith.cmpi ne, %6, %c0_i32_4 : i32
    scf.if %7 {
      %c0_5 = arith.constant 0 : index
      %c0_6 = arith.constant 0 : index
      %8 = vector.load %arg4[%c0_5, %c0_6] : memref<2x32xf32, #tpu.memory_space<vmem>>, vector<2x32xf32>
      %9 = arith.maximumf %8, %1 : vector<2x32xf32>
      %c0_7 = arith.constant 0 : index
      %c0_8 = arith.constant 0 : index
      %10 = vector.load %arg4[%c0_7, %c0_8] : memref<2x32xf32, #tpu.memory_space<vmem>>, vector<2x32xf32>
      tpu.vector_store %arg4[%c0_7, %c0_8], %9 {strides = array<i32>} : memref<2x32xf32, #tpu.memory_space<vmem>>, vector<2x32xf32>,
    } else {
    }
    return
  }
  func.func @transform_0(%arg0: i32, %arg1: i32, %arg2: i32) -> (i32, i32, i32) {
    %c0_i32 = arith.constant 0 : i32
    return %arg0, %arg2, %arg1 : i32, i32, i32
  }
  func.func @transform_1(%arg0: i32, %arg1: i32, %arg2: i32) -> (i32, i32) {
    %c0_i32 = arith.constant 0 : i32
    return %arg0, %arg1 : i32, i32
  }
}

</mosaic_0001>

<llo_original>
// kernel: tpu_custom_call.1
$region0: #{tpu_custom_call.1}
  #allocation0 [shape = 'u32[]', space=smem, size = 0x4, offset = 0x4, fixed_abs, tag = 'smem constant byte address 0x4 - core index']
  #allocation1 [shape = 'u32[144,128]{1,0:T(1,128)}', space=vmem, size = 0x12000, scoped, tag = 'internal scratch']
  %s0 = inlined_call_operand.hbm [shape: f32[2,8,32], index: 0, kind: input, shape index: {}]
  %s1 = inlined_call_operand.hbm [shape: f32[2,32], index: 1, kind: output, shape index: {}]
  %s2 = sld [smem:[#allocation0]]
  $region26: #{tpu_custom_call.1} parent=0
    _
  %s4 = ssub.s32 1, %s2
  %s5 = scalar_select 0, %s4, %s2
  $region1: #{tpu_custom_call.1} parent=0
    #allocation2 [shape = 'u8[8192]{0}', space=vmem, size = 0x2000, scoped, tag = 'input window, operand 0, single buffered']
    #allocation3 [shape = 's32[1]{0}', space=sflag, size = 0x4, scoped, tag = 'scoped memory for tpu_custom_call.1']
    #allocation4 [shape = 's32[1]{0}', space=sflag, size = 0x4, scoped, tag = 'scoped memory for tpu_custom_call.1']
    #allocation5 [shape = 'u8[1024]{0}', space=vmem, size = 0x400, scoped, tag = 'output window, operand 0, single buffered']
    %6 = vsyncpa [#allocation3], 0
    %7 = vsyncpa [#allocation4], 0
    // Predicated region
    $region2: #{tpu_custom_call.1} parent=1 // pred_check
      _
    $region3: #{tpu_custom_call.1} parent=1 // pred_check_branch
      %9 = sbr.rel (0) target = $region5
    $region4: #{tpu_custom_call.1} parent=1 // pred_region
      %s11 = ssub.s32 256, 256
      %12 = vsyncadd [#allocation3], %s11
      %s13 = sshll.u32 [#allocation2], 4
      %s14 = int_to_ptr.vmem [resolvable:$true] %s13
      %19 = dma.hbm_to_vmem [thread:$0]  %s0, 256, %s14, [#allocation3], 128, 128, 8
    $region5: #{tpu_custom_call.1} parent=1 // pred_fallthru
      _
    // Predicated region
    $region6: #{tpu_custom_call.1} parent=1 // pred_check
      _
    $region7: #{tpu_custom_call.1} parent=1 // pred_check_branch
      %21 = sbr.rel (0) target = $region9
    $region8: #{tpu_custom_call.1} parent=1 // pred_region
      %22 = dma.done [#allocation3], 256
    $region9: #{tpu_custom_call.1} parent=1 // pred_fallthru
      _
    %v23 = vld [vmem:[#allocation2] sm:$0xff]
    %v24 = vld [vmem:[#allocation2 + $0x8] sm:$0xff]
    %vm25 = vcmask 261120
    %v26 = vsel %vm25, %v23, -inf
    %v27 = vrot.slane %v26, 4
    %v28 = vmax.f32 %v26, %v27
    %v29 = vrot.slane %v28, 2
    %v30 = vmax.f32 %v28, %v29
    %v31 = vrot.slane %v30, 1
    %v32 = vmax.f32 %v30, %v31
    %v33 = vsel %vm25, %v24, -inf
    %v34 = vrot.slane %v33, 4
    %v35 = vmax.f32 %v33, %v34
    %v36 = vrot.slane %v35, 2
    %v37 = vmax.f32 %v35, %v36
    %v38 = vrot.slane %v37, 1
    %v39 = vmax.f32 %v37, %v38
    %p40 = scmp.eq.s32.totalorder 0, 0
    // Predicated region
    $region10: #{tpu_custom_call.1} parent=1 // pred_check
      %p41 = pneg %p40
    $region11: #{tpu_custom_call.1} parent=1 // pred_check_branch
      %43 = sbr.rel (%p41) target = $region13
    $region12: #{tpu_custom_call.1} parent=1 // pred_region
      %vm46 = vcmask 1041409
      %v47 = vsel %vm46, %v39, %v32
      %vm49 = vcmask 254976
      %50 = vst.msk [vmem:[#allocation5] sm:$0x3] %vm49, %v47
    $region13: #{tpu_custom_call.1} parent=1 // pred_fallthru
      _
    %p51 = scmp.gt.s32.totalorder 0, 0
    // Predicated region
    $region14: #{tpu_custom_call.1} parent=1 // pred_check
      %p52 = pneg %p51
    $region15: #{tpu_custom_call.1} parent=1 // pred_check_branch
      %54 = sbr.rel (%p52) target = $region17
    $region16: #{tpu_custom_call.1} parent=1 // pred_region
      %v55 = vld [vmem:[#allocation5] sm:$0x3]
      %vm58 = vcmask 1041409
      %v59 = vsel %vm58, %v39, %v32
      %v61 = vmax.f32 %v55, %v59
      %vm62 = vcmask 254976
      %63 = vst.msk [vmem:[#allocation5] sm:$0x3] %vm62, %v61
    $region17: #{tpu_custom_call.1} parent=1 // pred_fallthru
      _
    // Predicated region
    $region18: #{tpu_custom_call.1} parent=1 // pred_check
      _
    $region19: #{tpu_custom_call.1} parent=1 // pred_check_branch
      %65 = sbr.rel (0) target = $region21
    $region20: #{tpu_custom_call.1} parent=1 // pred_region
      %s67 = ssub.s32 32, 32
      %68 = vsyncadd [#allocation4], %s67
      %s70 = sshll.u32 [#allocation5], 4
      %s71 = int_to_ptr.vmem [resolvable:$true] %s70
      %73 = dma.vmem_to_hbm [thread:$0]  %s71, 32, %s1, [#allocation4]
    $region21: #{tpu_custom_call.1} parent=1 // pred_fallthru
      _
    // Predicated region
    $region22: #{tpu_custom_call.1} parent=1 // pred_check
      _
    $region23: #{tpu_custom_call.1} parent=1 // pred_check_branch
      %75 = sbr.rel (0) target = $region25
    $region24: #{tpu_custom_call.1} parent=1 // pred_region
      %76 = dma.done [#allocation4], 32
    $region25: #{tpu_custom_call.1} parent=1 // pred_fallthru
      _
    %77 = vsyncpa [#allocation3], 1
    %78 = vsyncpa [#allocation4], 1

</llo_original>
